<compile_context>
chip_gen: v5e
topology: v5e:2x2
jax: 0.10.0
libtpu: 0.0.40
codegen_flags: <defaults>
</compile_context>

<pallas_src>
import jax
import jax.numpy as jnp
from jax import lax
from jax.experimental import pallas as pl
from jax.experimental.pallas import tpu as pltpu


def _cdiv(a, b):
    return -(-a // b)


def _vmem_budgets():
    """(in-flight tiling budget, scoped vmem limit) in bytes, per TPU generation."""
    kind = ""
    try:
        kind = jax.devices()[0].device_kind.lower()
    except Exception:
        pass
    if "v5" in kind or "v6" in kind:
        # 128 MiB physical VMEM: large double-buffered blocks, raise the default scoped limit.
        return 64 * 1024 * 1024, 96 * 1024 * 1024
    # v7x has only 64 MiB per TensorCore; also the safe default for unknown targets.
    return 32 * 1024 * 1024, 48 * 1024 * 1024


def _choose_layout(B, C, HW, itemsize, budget):
    """Pick (TB, T_HW, n_hw_tiles, n_split, n_b_per_split, c_chunk).

    In-flight VMEM estimate: 2 inputs x 2 pipeline buffers of (TB, C, T_HW) in storage
    dtype + f32 cos accumulator scratch + per-chunk f32 temporaries.
    """
    c_chunk = 8 if itemsize >= 4 else 16

    def fits(tb, thw):
        inputs = 4 * tb * C * thw * itemsize
        scratch = 4 * tb * thw * 4
        temps = 5 * tb * min(C, c_chunk) * thw * 4
        return inputs + scratch + temps <= budget

    if fits(1, HW):
        # Full spatial extent: each (b, c) row is one contiguous DMA; fewest grid steps.
        t_hw = HW
        n_hw_tiles = 1
    else:
        per_lane = 4 * C * itemsize + 4 * 4 + 5 * min(C, c_chunk) * 4
        t_hw = max(128, (budget // per_lane) // 128 * 128)
        if HW >= 128:
            t_hw = min(t_hw, (HW // 128) * 128)
        else:
            t_hw = HW  # tiny spatial extent but huge C: fall back to full rows
        n_hw_tiles = _cdiv(HW, t_hw)

    divisors = [d for d in range(1, B + 1) if B % d == 0]
    fitting = [d for d in divisors if fits(d, t_hw)] or [1]
    tb = max(fitting)
    n_split = 1
    if n_hw_tiles == 1 and B >= 2:
        # Guarantee a usable "parallel" axis for the v7x megacore by splitting the
        # batch sweep into two disjoint halves.
        even = [d for d in fitting if (B // d) % 2 == 0]
        if even:
            tb = max(even)
            n_split = 2
    n_b_per_split = (B // tb) // n_split
    return tb, t_hw, n_hw_tiles, n_split, n_b_per_split, c_chunk


def make_cosine_loss(B, C, H, W, eps=1e-8, dtype=jnp.float32):
    HW = H * W
    itemsize = jnp.dtype(dtype).itemsize
    budget, vmem_limit = _vmem_budgets()
    TB, T_HW, n_hw_tiles, n_split, n_b_per_split, c_chunk = _choose_layout(
        B, C, HW, itemsize, budget)
    HW_out = n_hw_tiles * T_HW          # >= HW; lanes >= HW hold garbage, sliced in wrapper
    eps2 = float(eps) * float(eps)      # Python literal -> no captured traced constant

    def kernel(x1_ref, x2_ref, o_ref, cos_acc):
        b = pl.program_id(2)

        @pl.when(b == 0)
        def _():
            cos_acc[...] = jnp.zeros_like(cos_acc)

        # Channel-chunked accumulation (sublane-sized chunks) keeps live ranges bounded
        # so large lane-dense tiles don't spill.
        dot = n1 = n2 = None
        for c0 in range(0, C, c_chunk):
            cs = min(c_chunk, C - c0)
            x1 = x1_ref[:, c0:c0 + cs, :].astype(jnp.float32)   # (TB, cs, T_HW)
            x2 = x2_ref[:, c0:c0 + cs, :].astype(jnp.float32)
            d = jnp.sum(x1 * x2, axis=1)                        # (TB, T_HW)
            a = jnp.sum(x1 * x1, axis=1)
            c = jnp.sum(x2 * x2, axis=1)
            if dot is None:
                dot, n1, n2 = d, a, c
            else:
                dot, n1, n2 = dot + d, n1 + a, n2 + c

        # PyTorch semantics: dot / (max(||x1||, eps) * max(||x2||, eps)).
        # max(sqrt(n), eps) == sqrt(max(n, eps^2))  -> fused as EUP rsqrt, no divide.
        cos = dot * lax.rsqrt(jnp.maximum(n1, eps2)) * lax.rsqrt(jnp.maximum(n2, eps2))
        cos_acc[...] += cos             # raw cos; (1 - .) deferred to the wrapper

        @pl.when(b == pl.num_programs(2) - 1)
        def _():
            # Single cross-sublane reduce + lane-dense store, outside the batch sweep.
            o_ref[...] = jnp.sum(cos_acc[...], axis=0, keepdims=True)[None]

    grid_spec = pltpu.PrefetchScalarGridSpec(
        num_scalar_prefetch=0,
        # (split, hw-tile, batch-block): batch innermost so cos_acc stays resident;
        # split & hw-tile axes are independent -> "parallel" (megacore on v7x).
        grid=(n_split, n_hw_tiles, n_b_per_split),
        in_specs=[
            pl.BlockSpec((TB, C, T_HW), lambda s, t, b: (s * n_b_per_split + b, 0, t)),
            pl.BlockSpec((TB, C, T_HW), lambda s, t, b: (s * n_b_per_split + b, 0, t)),
        ],
        out_specs=pl.BlockSpec((1, 1, T_HW), lambda s, t, b: (s, 0, t)),
        scratch_shapes=[pltpu.VMEM((TB, T_HW), jnp.float32)],
    )

    cost = pl.CostEstimate(
        flops=int(6 * B * C * HW + 5 * B * HW),
        transcendentals=int(2 * B * HW),
        bytes_accessed=int(2 * B * C * HW * itemsize + n_split * HW_out * 4),
    )

    pc = pl.pallas_call(
        kernel,
        out_shape=jax.ShapeDtypeStruct((n_split, 1, HW_out), jnp.float32),
        grid_spec=grid_spec,
        compiler_params=pltpu.CompilerParams(
            dimension_semantics=("parallel", "parallel", "arbitrary"),
            vmem_limit_bytes=vmem_limit,
        ),
        cost_estimate=cost,
    )

    @jax.jit
    def cosine_loss(x1, x2):
        # NCHW -> (B, C, H*W): free reshape, keeps HBM layout (no transpose, NO pad copy).
        # INVARIANT: output lanes >= HW may hold garbage from the ragged last hw tile;
        # they MUST be dropped by the [:HW] slice below.
        x1r = x1.reshape(B, C, HW)
        x2r = x2.reshape(B, C, HW)
        per_pos = pc(x1r, x2r)                      # (n_split, 1, HW_out): sum of cos over batch
        total_cos = jnp.sum(per_pos[:, 0, :HW])
        return 1.0 - total_cos / (B * HW)

    return cosine_loss


def reference_loss(x1, x2, eps=1e-8):
    # Matches torch.nn.CosineSimilarity: each norm clamped to eps separately.
    x1 = x1.astype(jnp.float32)
    x2 = x2.astype(jnp.float32)
    dot = jnp.sum(x1 * x2, axis=1)
    n1 = jnp.maximum(jnp.sqrt(jnp.sum(x1 * x1, axis=1)), eps)
    n2 = jnp.maximum(jnp.sqrt(jnp.sum(x2 * x2, axis=1)), eps)
    cos = dot / (n1 * n2)
    return jnp.mean(1.0 - cos)


if __name__ == "__main__":
    B, C, H, W = 2, 4, 16, 16
    key = jax.random.PRNGKey(0)
    k1, k2 = jax.random.split(key)
    x1 = jax.random.normal(k1, (B, C, H, W), dtype=jnp.float32)
    x2 = jax.random.normal(k2, (B, C, H, W), dtype=jnp.float32)

    loss_fn = make_cosine_loss(B, C, H, W)
    loss = loss_fn(x1, x2)
    jax.block_until_ready(loss)

    ref = reference_loss(x1, x2)
    assert jnp.allclose(loss, ref, atol=1e-5, rtol=1e-5), (loss, ref)

    print("KERNEL_OK")
</pallas_src>

<mosaic_0001>
module attributes {stable_mosaic.version = 11 : i64} {
  func.func @kernel(%arg0: i32, %arg1: i32, %arg2: i32, %arg3: memref<1x4x256xf32, #tpu.memory_space<vmem>>, %arg4: memref<1x4x256xf32, #tpu.memory_space<vmem>>, %arg5: memref<1x1x256xf32, #tpu.memory_space<vmem>>, %arg6: memref<1x256xf32, #tpu.memory_space<vmem>>) attributes {dimension_semantics = [#tpu.dimension_semantics<parallel>, #tpu.dimension_semantics<parallel>, #tpu.dimension_semantics<arbitrary>], iteration_bounds = array<i64: 2, 1, 1>, scalar_prefetch = 0 : i64, scratch_operands = 1 : i64, tpu.core_type = #tpu.core_type<tc>, window_params = [{transform_indices = @transform_0, window_bounds = array<i64: 1, 4, 256>}, {transform_indices = @transform_1, window_bounds = array<i64: 1, 4, 256>}, {transform_indices = @transform_2, window_bounds = array<i64: 1, 1, 256>}]} {
    %c0_i32 = arith.constant 0 : i32
    %0 = arith.cmpi eq, %arg2, %c0_i32 : i32
    %1 = arith.extui %0 : i1 to i32
    %c0_i32_0 = arith.constant 0 : i32
    %2 = arith.cmpi ne, %1, %c0_i32_0 : i32
    scf.if %2 {
      %cst_16 = arith.constant 0.000000e+00 : f32
      %25 = vector.broadcast %cst_16 : f32 to vector<1x256xf32>
      %c0_17 = arith.constant 0 : index
      %c0_18 = arith.constant 0 : index
      %26 = vector.load %arg6[%c0_17, %c0_18] : memref<1x256xf32, #tpu.memory_space<vmem>>, vector<1x256xf32>
      tpu.vector_store %arg6[%c0_17, %c0_18], %25 {strides = array<i32>} : memref<1x256xf32, #tpu.memory_space<vmem>>, vector<1x256xf32>,
    } else {
    }
    %c0 = arith.constant 0 : index
    %c0_1 = arith.constant 0 : index
    %c0_2 = arith.constant 0 : index
    %3 = vector.load %arg3[%c0, %c0_1, %c0_2] : memref<1x4x256xf32, #tpu.memory_space<vmem>>, vector<1x4x256xf32>
    %c0_3 = arith.constant 0 : index
    %c0_4 = arith.constant 0 : index
    %c0_5 = arith.constant 0 : index
    %4 = vector.load %arg4[%c0_3, %c0_4, %c0_5] : memref<1x4x256xf32, #tpu.memory_space<vmem>>, vector<1x4x256xf32>
    %5 = arith.mulf %3, %4 : vector<1x4x256xf32>
    %cst = arith.constant dense<0.000000e+00> : vector<1x256xf32>
    %6 = vector.multi_reduction <add>, %5, %cst [1] : vector<1x4x256xf32> to vector<1x256xf32>
    %7 = arith.mulf %3, %3 : vector<1x4x256xf32>
    %cst_6 = arith.constant dense<0.000000e+00> : vector<1x256xf32>
    %8 = vector.multi_reduction <add>, %7, %cst_6 [1] : vector<1x4x256xf32> to vector<1x256xf32>
    %9 = arith.mulf %4, %4 : vector<1x4x256xf32>
    %cst_7 = arith.constant dense<0.000000e+00> : vector<1x256xf32>
    %10 = vector.multi_reduction <add>, %9, %cst_7 [1] : vector<1x4x256xf32> to vector<1x256xf32>
    %cst_8 = arith.constant 1.000000e-16 : f32
    %11 = vector.broadcast %cst_8 : f32 to vector<1x256xf32>
    %12 = arith.maximumf %8, %11 : vector<1x256xf32>
    %13 = math.rsqrt %12 : vector<1x256xf32>
    %14 = arith.mulf %6, %13 : vector<1x256xf32>
    %cst_9 = arith.constant 1.000000e-16 : f32
    %15 = vector.broadcast %cst_9 : f32 to vector<1x256xf32>
    %16 = arith.maximumf %10, %15 : vector<1x256xf32>
    %17 = math.rsqrt %16 : vector<1x256xf32>
    %18 = arith.mulf %14, %17 : vector<1x256xf32>
    %c0_10 = arith.constant 0 : index
    %c0_11 = arith.constant 0 : index
    %19 = vector.load %arg6[%c0_10, %c0_11] : memref<1x256xf32, #tpu.memory_space<vmem>>, vector<1x256xf32>
    %20 = arith.addf %19, %18 : vector<1x256xf32>
    %c0_12 = arith.constant 0 : index
    %c0_13 = arith.constant 0 : index
    %21 = vector.load %arg6[%c0_12, %c0_13] : memref<1x256xf32, #tpu.memory_space<vmem>>, vector<1x256xf32>
    tpu.vector_store %arg6[%c0_12, %c0_13], %20 {strides = array<i32>} : memref<1x256xf32, #tpu.memory_space<vmem>>, vector<1x256xf32>,
    %c0_i32_14 = arith.constant 0 : i32
    %22 = arith.cmpi eq, %arg2, %c0_i32_14 : i32
    %23 = arith.extui %22 : i1 to i32
    %c0_i32_15 = arith.constant 0 : i32
    %24 = arith.cmpi ne, %23, %c0_i32_15 : i32
    scf.if %24 {
      %c0_16 = arith.constant 0 : index
      %c0_17 = arith.constant 0 : index
      %25 = vector.load %arg6[%c0_16, %c0_17] : memref<1x256xf32, #tpu.memory_space<vmem>>, vector<1x256xf32>
      %cst_18 = arith.constant dense<0.000000e+00> : vector<256xf32>
      %26 = vector.multi_reduction <add>, %25, %cst_18 [0] : vector<1x256xf32> to vector<256xf32>
      %27 = vector.shape_cast %26 : vector<256xf32> to vector<1x256xf32>
      %28 = vector.shape_cast %27 : vector<1x256xf32> to vector<1x1x256xf32>
      %c0_19 = arith.constant 0 : index
      %c0_20 = arith.constant 0 : index
      %c0_21 = arith.constant 0 : index
      %29 = vector.load %arg5[%c0_19, %c0_20, %c0_21] : memref<1x1x256xf32, #tpu.memory_space<vmem>>, vector<1x1x256xf32>
      tpu.vector_store %arg5[%c0_19, %c0_20, %c0_21], %28 {strides = array<i32>} : memref<1x1x256xf32, #tpu.memory_space<vmem>>, vector<1x1x256xf32>,
    } else {
    }
    return
  }
  func.func @transform_0(%arg0: i32, %arg1: i32, %arg2: i32) -> (i32, i32, i32) {
    %c1_i32 = arith.constant 1 : i32
    %0 = arith.muli %arg0, %c1_i32 : i32
    %1 = arith.addi %0, %arg2 : i32
    %c0_i32 = arith.constant 0 : i32
    %c0_i32_0 = arith.constant 0 : i32
    return %1, %c0_i32, %arg1 : i32, i32, i32
  }
  func.func @transform_1(%arg0: i32, %arg1: i32, %arg2: i32) -> (i32, i32, i32) {
    %c1_i32 = arith.constant 1 : i32
    %0 = arith.muli %arg0, %c1_i32 : i32
    %1 = arith.addi %0, %arg2 : i32
    %c0_i32 = arith.constant 0 : i32
    %c0_i32_0 = arith.constant 0 : i32
    return %1, %c0_i32, %arg1 : i32, i32, i32
  }
  func.func @transform_2(%arg0: i32, %arg1: i32, %arg2: i32) -> (i32, i32, i32) {
    %c0_i32 = arith.constant 0 : i32
    %c0_i32_0 = arith.constant 0 : i32
    return %arg0, %c0_i32, %arg1 : i32, i32, i32
  }
}

</mosaic_0001>

<llo_original>
// kernel: cosine_loss.1
$region0: #{cosine_loss.1}
  #allocation0 [shape = 'u32[]', space=smem, size = 0x4, offset = 0x4, fixed_abs, tag = 'smem constant byte address 0x4 - core index']
  #allocation1 [shape = 'u32[72,128]{1,0:T(1,128)}', space=vmem, size = 0x9000, scoped, tag = 'internal scratch']
  #allocation2 [shape = 'f32[1,256]{1,0:T(1,128)}', space=vmem, size = 0x400, scoped, tag = 'scratch operand']
  %s0 = inlined_call_operand.vmem [shape: f32[2,4,256], index: 0, kind: input, shape index: {}]
  %s1 = inlined_call_operand.vmem [shape: f32[2,4,256], index: 1, kind: input, shape index: {}]
  %s2 = inlined_call_operand.vmem [shape: f32[2,1,256], index: 2, kind: output, shape index: {}]
  %s3 = sld [smem:[#allocation0]]
  $region49: #{cosine_loss.1} parent=0
    _
  %s5 = ssub.s32 1, %s3
  %s6 = scalar_select 0, %s5, %s3
  loop: start=0, step=1, limit=4
  $region2: #{cosine_loss.1} parent=0 // loop_pre_header
    _
  $region3: #{cosine_loss.1} parent=0 // loop_header
    %s8 = sphi 0, %s12
    %p9 = scmp.ge.s32.totalorder %s8, 4
    %s15 = sphi 0, %s34
    %s16 = sphi 0, %s30
    %s17 = sphi 0, %s26
    %s18 = sphi 0, %s15
    %s19 = sphi 0, %s16
    %s20 = sphi 0, %s17
    %s21 = sphi 0, %s18
    %s22 = sphi 0, %s19
    %s23 = sphi 0, %s20
    %s41 = sphi 0, %s43
    %s44 = sphi 0, %s41
    %s45 = sphi 0, %s44
    %s61 = sphi 0, %s45
    %s71 = sphi 0, %s73
    %s74 = sphi 0, %s71
    %s75 = sphi 0, %s74
    %s91 = sphi 0, %s75
    %s99 = sphi 0, %s101
    %s102 = sphi 0, %s99
    %s103 = sphi 0, %s102
    %s119 = sphi 0, %s103
  $region4: #{cosine_loss.1} parent=0 // loop_header_branch
    %11 = sbr.rel (%p9) target = $region8
  $region5: #{cosine_loss.1} parent=0 // loop_body
    %s13 = ssub.s32 %s8, 1
    %s14 = ssub.s32 %s8, 2
    %s24 = sadd.s32 1, %s17
    %p25 = scmp.ge.s32.totalorder %s24, 1
    %s26 = scalar_select %p25, 0, %s24
    %s27 = sadd.s32 1, %s16
    %s28 = scalar_select %p25, %s27, %s16
    %p29 = scmp.ge.s32.totalorder %s28, 1
    %s30 = scalar_select %p29, 0, %s28
    %s31 = sadd.s32 1, %s15
    %s32 = scalar_select %p29, %s31, %s15
    %p33 = scmp.ge.s32.totalorder %s32, 2
    %s34 = scalar_select %p33, 0, %s32
    %s35 = sadd.s32 %s15, %s17
    %s36 = sadd.s32 %s34, %s26
    %s37 = ssub.s32 %s35, %s36
    %s38 = ssub.s32 %s16, %s30
    %s39 = sor.u32 %s37, %s38
    %p40 = scmp.eq.s32.totalorder %s39, 0
    %s42 = sadd.s32 %s41, 1
    %s43 = scalar_select %p40, %s41, %s42
    %p46 = pneg %p40
    %p47 = scmp.eq.s32.totalorder %s8, 1
    %p48 = por %p46, %p47
    %p49 = scmp.ne.s32.totalorder %s41, %s44
    %p50 = scmp.eq.s32.totalorder %s8, 0
    %p51 = por %p49, %p50
    %p52 = scmp.ne.s32.totalorder %s41, %s44
    %p53 = scmp.eq.s32.totalorder %s13, 1
    %p54 = por %p52, %p53
    %p55 = scmp.ne.s32.totalorder %s44, %s45
    %p56 = scmp.eq.s32.totalorder %s13, 0
    %p57 = por %p55, %p56
    %p58 = scmp.ne.s32.totalorder %s44, %s45
    %p59 = scmp.eq.s32.totalorder %s14, 1
    %p60 = por %p58, %p59
    %p62 = scmp.ne.s32.totalorder %s45, %s61
    %p63 = scmp.eq.s32.totalorder %s14, 0
    %p64 = por %p62, %p63
    %s65 = sadd.s32 %s15, %s17
    %s66 = sadd.s32 %s34, %s26
    %s67 = ssub.s32 %s65, %s66
    %s68 = ssub.s32 %s16, %s30
    %s69 = sor.u32 %s67, %s68
    %p70 = scmp.eq.s32.totalorder %s69, 0
    %s72 = sadd.s32 %s71, 1
    %s73 = scalar_select %p70, %s71, %s72
    %p76 = pneg %p70
    %p77 = scmp.eq.s32.totalorder %s8, 1
    %p78 = por %p76, %p77
    %p79 = scmp.ne.s32.totalorder %s71, %s74
    %p80 = scmp.eq.s32.totalorder %s8, 0
    %p81 = por %p79, %p80
    %p82 = scmp.ne.s32.totalorder %s71, %s74
    %p83 = scmp.eq.s32.totalorder %s13, 1
    %p84 = por %p82, %p83
    %p85 = scmp.ne.s32.totalorder %s74, %s75
    %p86 = scmp.eq.s32.totalorder %s13, 0
    %p87 = por %p85, %p86
    %p88 = scmp.ne.s32.totalorder %s74, %s75
    %p89 = scmp.eq.s32.totalorder %s14, 1
    %p90 = por %p88, %p89
    %p92 = scmp.ne.s32.totalorder %s75, %s91
    %p93 = scmp.eq.s32.totalorder %s14, 0
    %p94 = por %p92, %p93
    %s95 = ssub.s32 %s15, %s34
    %s96 = ssub.s32 %s16, %s30
    %s97 = sor.u32 %s95, %s96
    %p98 = scmp.eq.s32.totalorder %s97, 0
    %s100 = sadd.s32 %s99, 1
    %s101 = scalar_select %p98, %s99, %s100
    %p104 = pneg %p98
    %p105 = scmp.eq.s32.totalorder %s8, 1
    %p106 = por %p104, %p105
    %p107 = scmp.ne.s32.totalorder %s99, %s102
    %p108 = scmp.eq.s32.totalorder %s8, 0
    %p109 = por %p107, %p108
    %p110 = scmp.ne.s32.totalorder %s99, %s102
    %p111 = scmp.eq.s32.totalorder %s13, 1
    %p112 = por %p110, %p111
    %p113 = scmp.ne.s32.totalorder %s102, %s103
    %p114 = scmp.eq.s32.totalorder %s13, 0
    %p115 = por %p113, %p114
    %p116 = scmp.ne.s32.totalorder %s102, %s103
    %p117 = scmp.eq.s32.totalorder %s14, 1
    %p118 = por %p116, %p117
    %p120 = scmp.ne.s32.totalorder %s103, %s119
    %p121 = scmp.eq.s32.totalorder %s14, 0
    %p122 = por %p120, %p121
    %p123 = scmp.le.s32.totalorder 1, %s8
    %p124 = scmp.lt.s32.totalorder %s8, 3
    %p125 = pnand %p123, %p124
    %p126 = pneg %p125
    // Predicated region
    $region9: #{cosine_loss.1} parent=5 // pred_check
      _
    $region10: #{cosine_loss.1} parent=5 // pred_check_branch
      %128 = sbr.rel (%p125) target = $region12
    $region11: #{cosine_loss.1} parent=5 // pred_region
      %s129 = ssub.s32 %s8, 1
    $region12: #{cosine_loss.1} parent=5 // pred_fallthru
      _
    %p130 = scmp.lt.s32.totalorder %s8, 2
    // Predicated region
    $region13: #{cosine_loss.1} parent=5 // pred_check
      %p131 = pneg %p130
    $region14: #{cosine_loss.1} parent=5 // pred_check_branch
      %133 = sbr.rel (%p131) target = $region16
    $region15: #{cosine_loss.1} parent=5 // pred_region
      // Predicated region
      $region17: #{cosine_loss.1} parent=15 // pred_check
        %p134 = pneg %p51
      $region18: #{cosine_loss.1} parent=15 // pred_check_branch
        %136 = sbr.rel (%p134) target = $region20
      $region19: #{cosine_loss.1} parent=15 // pred_region
        %s137 = sadd.s32 %s15, %s17
        %s138 = smul.u32 2, %s16
        %p139 = scmp.lt.s32.totalorder %s137, 1
        %s140 = scalar_select %p139, %s137, 1
        %p141 = scmp.lt.s32.totalorder %s138, 1
        %s142 = scalar_select %p141, %s138, 1
        %s143 = smul.addr %s140, 2
        %s144 = sadd.s32 %s142, %s143
        %s145 = smul.addr %s144, 4
        %s146 = scalar_lea.vmem %s0, %s145
        %s147 = sadd.s32 %s15, %s17
        %s148 = smul.u32 2, %s16
      $region20: #{cosine_loss.1} parent=15 // pred_fallthru
        _
      // Predicated region
      $region21: #{cosine_loss.1} parent=15 // pred_check
        %p149 = pneg %p81
      $region22: #{cosine_loss.1} parent=15 // pred_check_branch
        %151 = sbr.rel (%p149) target = $region24
      $region23: #{cosine_loss.1} parent=15 // pred_region
        %s152 = sadd.s32 %s15, %s17
        %s153 = smul.u32 2, %s16
        %p154 = scmp.lt.s32.totalorder %s152, 1
        %s155 = scalar_select %p154, %s152, 1
        %p156 = scmp.lt.s32.totalorder %s153, 1
        %s157 = scalar_select %p156, %s153, 1
        %s158 = smul.addr %s155, 2
        %s159 = sadd.s32 %s157, %s158
        %s160 = smul.addr %s159, 4
        %s161 = scalar_lea.vmem %s1, %s160
        %s162 = sadd.s32 %s15, %s17
        %s163 = smul.u32 2, %s16
      $region24: #{cosine_loss.1} parent=15 // pred_fallthru
        _
    $region16: #{cosine_loss.1} parent=5 // pred_fallthru
      _
    %p164 = scmp.le.s32.totalorder 1, %s8
    %p165 = scmp.lt.s32.totalorder %s8, 3
    %p166 = pnand %p164, %p165
    %p167 = pneg %p166
    // Predicated region
    $region25: #{cosine_loss.1} parent=5 // pred_check
      _
    $region26: #{cosine_loss.1} parent=5 // pred_check_branch
      %169 = sbr.rel (%p166) target = $region28
    $region27: #{cosine_loss.1} parent=5 // pred_region
      %s170 = ssub.s32 %s8, 1
      %s171 = sadd.s32 %s18, %s20
      %s172 = smul.u32 2, %s19
      %p173 = scmp.lt.s32.totalorder %s171, 1
      %s174 = scalar_select %p173, %s171, 1
      %p175 = scmp.lt.s32.totalorder %s172, 1
      %s176 = scalar_select %p175, %s172, 1
      %s177 = smul.addr %s174, 2
      %s178 = sadd.s32 %s176, %s177
      %s179 = smul.addr %s178, 4
      %s180 = scalar_lea.vmem %s0, %s179
      %p181 = pneg %p57
      %p182 = pneg %p54
      %s183 = sadd.s32 %s18, %s20
      %s184 = smul.u32 2, %s19
      %p185 = scmp.lt.s32.totalorder %s183, 1
      %s186 = scalar_select %p185, %s183, 1
      %p187 = scmp.lt.s32.totalorder %s184, 1
      %s188 = scalar_select %p187, %s184, 1
      %s189 = smul.addr %s186, 2
      %s190 = sadd.s32 %s188, %s189
      %s191 = smul.addr %s190, 4
      %s192 = scalar_lea.vmem %s1, %s191
      %p193 = pneg %p87
      %p194 = pneg %p84
      %p195 = pneg %p115
      %p196 = pneg %p112
      %s197 = smul.u32 2, %s19
      %p198 = scmp.lt.s32.totalorder %s18, 1
      %s199 = scalar_select %p198, %s18, 1
      %p200 = scmp.lt.s32.totalorder %s197, 1
      %s201 = scalar_select %p200, %s197, 1
      %s202 = smul.addr %s199, 2
      %s203 = sadd.s32 %s201, %s202
      %s204 = scalar_lea.vmem %s2, %s203
      %s205 = sadd.s32 %s18, %s20
      %s206 = smul.u32 2, %s19
      %p207 = scmp.lt.s32.totalorder %s205, 1
      %s208 = scalar_select %p207, %s205, 1
      %p209 = scmp.lt.s32.totalorder %s206, 1
      %s210 = scalar_select %p209, %s206, 1
      %s211 = smul.addr %s208, 2
      %s212 = sadd.s32 %s210, %s211
      %s213 = smul.addr %s212, 4
      %s214 = scalar_lea.vmem %s0, %s213
      %s215 = sadd.s32 %s18, %s20
      %s216 = smul.u32 2, %s19
      %s217 = sadd.s32 %s18, %s20
      %s218 = smul.u32 2, %s19
      %p219 = scmp.lt.s32.totalorder %s217, 1
      %s220 = scalar_select %p219, %s217, 1
      %p221 = scmp.lt.s32.totalorder %s218, 1
      %s222 = scalar_select %p221, %s218, 1
      %s223 = smul.addr %s220, 2
      %s224 = sadd.s32 %s222, %s223
      %s225 = smul.addr %s224, 4
      %s226 = scalar_lea.vmem %s1, %s225
      %s227 = sadd.s32 %s18, %s20
      %s228 = smul.u32 2, %s19
      %s229 = smul.u32 2, %s19
      %p230 = scmp.lt.s32.totalorder %s18, 1
      %s231 = scalar_select %p230, %s18, 1
      %p232 = scmp.lt.s32.totalorder %s229, 1
      %s233 = scalar_select %p232, %s229, 1
      %s234 = smul.addr %s231, 2
      %s235 = sadd.s32 %s233, %s234
      %s236 = scalar_lea.vmem %s2, %s235
      %s237 = smul.u32 2, %s19
      %p238 = scmp.eq.s32.totalorder %s20, 0
      // Predicated region
      $region29: #{cosine_loss.1} parent=27 // pred_check
        %p239 = pneg %p238
      $region30: #{cosine_loss.1} parent=27 // pred_check_branch
        %241 = sbr.rel (%p239) target = $region32
      $region31: #{cosine_loss.1} parent=27 // pred_region
        %v242 = vlaneseq
        %vm243 = vcmp.ge.s32.totalorder %v242, 0
        %vm244 = vcmp.lt.s32.totalorder %v242, 256
        %vm245 = vmand %vm243, %vm244
        %246 = vst.msk [vmem:[#allocation2] sm:$0x3] %vm245, 0.0
      $region32: #{cosine_loss.1} parent=27 // pred_fallthru
        _
      %v247 = vld [vmem:[%s214] sm:$0xff]
      %v248 = vld [vmem:[%s226] sm:$0xff]
      %v249 = vmul.f32 %v247, %v248
      %251 = vst [vmem:[#allocation1] ss:$2 sm:$0xff] %v249
      %v252 = vld.sshfl [vmem:[#allocation1] sm:$0xff pattern:$0x75316420]
      %v253 = vld.sshfl [vmem:[#allocation1 + $0x8] sm:$0xff pattern:$0x75316420]
      %vm256 = vcmask 1043456
      %v257 = vsel %vm256, %v252, 0.0
      %v258 = vrot.slane %v257, 4
      %v259 = vadd.f32 %v257, %v258
      %v260 = vrot.slane %v259, 2
      %v261 = vadd.f32 %v259, %v260
      %v262 = vrot.slane %v261, 1
      %v263 = vadd.f32 %v261, %v262
      %v264 = vsel %vm256, %v253, 0.0
      %v265 = vrot.slane %v264, 4
      %v266 = vadd.f32 %v264, %v265
      %v267 = vrot.slane %v266, 2
      %v268 = vadd.f32 %v266, %v267
      %v269 = vrot.slane %v268, 1
      %v270 = vadd.f32 %v268, %v269
      %v271 = vmul.f32 %v247, %v247
      %273 = vst [vmem:[#allocation1] ss:$2 sm:$0xff] %v271
      %v274 = vld.sshfl [vmem:[#allocation1] sm:$0xff pattern:$0x75316420]
      %v275 = vld.sshfl [vmem:[#allocation1 + $0x8] sm:$0xff pattern:$0x75316420]
      %v278 = vsel %vm256, %v274, 0.0
      %v279 = vrot.slane %v278, 4
      %v280 = vadd.f32 %v278, %v279
      %v281 = vrot.slane %v280, 2
      %v282 = vadd.f32 %v280, %v281
      %v283 = vrot.slane %v282, 1
      %v284 = vadd.f32 %v282, %v283
      %v285 = vsel %vm256, %v275, 0.0
      %v286 = vrot.slane %v285, 4
      %v287 = vadd.f32 %v285, %v286
      %v288 = vrot.slane %v287, 2
      %v289 = vadd.f32 %v287, %v288
      %v290 = vrot.slane %v289, 1
      %v291 = vadd.f32 %v289, %v290
      %v292 = vmul.f32 %v248, %v248
      %294 = vst [vmem:[#allocation1] ss:$2 sm:$0xff] %v292
      %v295 = vld.sshfl [vmem:[#allocation1] sm:$0xff pattern:$0x75316420]
      %v296 = vld.sshfl [vmem:[#allocation1 + $0x8] sm:$0xff pattern:$0x75316420]
      %v299 = vsel %vm256, %v295, 0.0
      %v300 = vrot.slane %v299, 4
      %v301 = vadd.f32 %v299, %v300
      %v302 = vrot.slane %v301, 2
      %v303 = vadd.f32 %v301, %v302
      %v304 = vrot.slane %v303, 1
      %v305 = vadd.f32 %v303, %v304
      %v306 = vsel %vm256, %v296, 0.0
      %v307 = vrot.slane %v306, 4
      %v308 = vadd.f32 %v306, %v307
      %v309 = vrot.slane %v308, 2
      %v310 = vadd.f32 %v308, %v309
      %v311 = vrot.slane %v310, 1
      %v312 = vadd.f32 %v310, %v311
      %v313 = vmax.f32 %v284, 1e-16
      %v314 = vmax.f32 %v291, 1e-16
      %v315 = vrsqrt.pop %v313
      %v316 = vmul.f32 %v315, %v313
      %v317 = vmul.f32 %v316, %v315
      %v318 = vmul.f32 0.5, %v317
      %v319 = vsub.f32 1.5, %v318
      %v320 = vmul.f32 %v315, %v319
      %vm321 = vweird.f32 %v313
      %vm322 = vweird.f32 %v315
      %vm323 = vmor %vm321, %vm322
      %v324 = vsel %vm323, %v315, %v320
      %v325 = vrsqrt.pop %v314
      %v326 = vmul.f32 %v325, %v314
      %v327 = vmul.f32 %v326, %v325
      %v328 = vmul.f32 0.5, %v327
      %v329 = vsub.f32 1.5, %v328
      %v330 = vmul.f32 %v325, %v329
      %vm331 = vweird.f32 %v314
      %vm332 = vweird.f32 %v325
      %vm333 = vmor %vm331, %vm332
      %v334 = vsel %vm333, %v325, %v330
      %v335 = vmul.f32 %v263, %v324
      %v336 = vmul.f32 %v270, %v334
      %v337 = vmax.f32 %v305, 1e-16
      %v338 = vmax.f32 %v312, 1e-16
      %v339 = vrsqrt.pop %v337
      %v340 = vmul.f32 %v339, %v337
      %v341 = vmul.f32 %v340, %v339
      %v342 = vmul.f32 0.5, %v341
      %v343 = vsub.f32 1.5, %v342
      %v344 = vmul.f32 %v339, %v343
      %vm345 = vweird.f32 %v337
      %vm346 = vweird.f32 %v339
      %vm347 = vmor %vm345, %vm346
      %v348 = vsel %vm347, %v339, %v344
      %v349 = vrsqrt.pop %v338
      %v350 = vmul.f32 %v349, %v338
      %v351 = vmul.f32 %v350, %v349
      %v352 = vmul.f32 0.5, %v351
      %v353 = vsub.f32 1.5, %v352
      %v354 = vmul.f32 %v349, %v353
      %vm355 = vweird.f32 %v338
      %vm356 = vweird.f32 %v349
      %vm357 = vmor %vm355, %vm356
      %v358 = vsel %vm357, %v349, %v354
      %v359 = vmul.f32 %v335, %v348
      %v360 = vmul.f32 %v336, %v358
      %v361 = vld [vmem:[#allocation2] sm:$0x3]
      %v364 = vrot.slane %v360, 7
      %vm365 = vcmask 1040384
      %v366 = vsel %vm365, %v359, %v364
      %v368 = vadd.f32 %v361, %v366
      %v369 = vlaneseq
      %vm370 = vcmp.ge.s32.totalorder %v369, 0
      %vm371 = vcmp.lt.s32.totalorder %v369, 256
      %vm372 = vmand %vm370, %vm371
      %373 = vst.msk [vmem:[#allocation2] sm:$0x3] %vm372, %v368
      // Predicated region
      $region33: #{cosine_loss.1} parent=27 // pred_check
        %p374 = pneg %p238
      $region34: #{cosine_loss.1} parent=27 // pred_check_branch
        %376 = sbr.rel (%p374) target = $region36
      $region35: #{cosine_loss.1} parent=27 // pred_region
        %v377 = vld [vmem:[#allocation2] sm:$0x3]
        %v378 = vadd.f32 %v377, 0.0
        %379 = vst.msk [vmem:[%s236] sm:$0x3] %vm372, %v378
      $region36: #{cosine_loss.1} parent=27 // pred_fallthru
        _
      %s380 = smul.u32 2, %s19
      %p381 = scmp.lt.s32.totalorder %s18, 1
      %s382 = scalar_select %p381, %s18, 1
      %p383 = scmp.lt.s32.totalorder %s380, 1
      %s384 = scalar_select %p383, %s380, 1
      %s385 = smul.addr %s382, 2
      %s386 = sadd.s32 %s384, %s385
      %s387 = scalar_lea.vmem %s2, %s386
      // Predicated region
      $region37: #{cosine_loss.1} parent=27 // pred_check
        %p388 = pneg %p112
      $region38: #{cosine_loss.1} parent=27 // pred_check_branch
        %390 = sbr.rel (%p388) target = $region40
      $region39: #{cosine_loss.1} parent=27 // pred_region
        %s391 = smul.u32 2, %s19
      $region40: #{cosine_loss.1} parent=27 // pred_fallthru
        _
    $region28: #{cosine_loss.1} parent=5 // pred_fallthru
      _
    %p392 = scmp.le.s32.totalorder 2, %s8
    // Predicated region
    $region41: #{cosine_loss.1} parent=5 // pred_check
      %p393 = pneg %p392
    $region42: #{cosine_loss.1} parent=5 // pred_check_branch
      %395 = sbr.rel (%p393) target = $region44
    $region43: #{cosine_loss.1} parent=5 // pred_region
      %s396 = ssub.s32 %s8, 2
      // Predicated region
      $region45: #{cosine_loss.1} parent=43 // pred_check
        %p397 = pneg %p118
      $region46: #{cosine_loss.1} parent=43 // pred_check_branch
        %399 = sbr.rel (%p397) target = $region48
      $region47: #{cosine_loss.1} parent=43 // pred_region
        %s400 = smul.u32 2, %s22
        %p401 = scmp.lt.s32.totalorder %s21, 1
        %s402 = scalar_select %p401, %s21, 1
        %p403 = scmp.lt.s32.totalorder %s400, 1
        %s404 = scalar_select %p403, %s400, 1
        %s405 = smul.addr %s402, 2
        %s406 = sadd.s32 %s404, %s405
        %s407 = scalar_lea.vmem %s2, %s406
      $region48: #{cosine_loss.1} parent=43 // pred_fallthru
        _
    $region44: #{cosine_loss.1} parent=5 // pred_fallthru
      _
  $region6: #{cosine_loss.1} parent=0 // loop_footer
    %s12 = sadd.s32 1, %s8
  $region7: #{cosine_loss.1} parent=0 // loop_footer_branch
    %7 = sbr.rel target = $region3
  $region8: #{cosine_loss.1} parent=0 // loop_exit
    _

</llo_original>
